<compile_context>
chip_gen: v7x
topology: tpu7x:2x2x1
jax: 0.10.0
libtpu: 0.0.40
codegen_flags: <defaults>
</compile_context>

<pallas_src>
import jax
import jax.numpy as jnp
from jax.experimental import pallas as pl
from jax.experimental.pallas import tpu as pltpu

_LANES = 128


def _cdiv(a, b):
    return -(-a // b)


def _round_up(a, b):
    return _cdiv(a, b) * b


def _residual_relu_kernel(x_ref, o_ref):
    # blocks(x) + shortcut(x) followed by ReLU, fused elementwise on one slab.
    x = x_ref[...]
    o_ref[...] = jnp.maximum(x + x, jnp.zeros_like(x))


def _choose_tile_rows(rows, itemsize):
    """Pick a row-tile that is sublane-packed for the dtype and ~1 MiB."""
    sub = max(8, 32 // itemsize)                       # f32->8, bf16->16, int8->32
    cap = max(sub, (1 << 20) // (_LANES * itemsize))   # ~1 MiB per block
    if rows > cap:
        return cap                                     # many big blocks
    if rows >= 1024:
        # Enough work to split: give v7x's two TensorCores >= 1 block each.
        return _round_up(_cdiv(rows, 2), sub)
    return _round_up(rows, sub)                        # single block


def residual_block_forward(x, in_channels, out_channels, *, alias_output=False):
    """Pallas implementation of residual_block.forward => relu(x + x).

    blocks and shortcut are both nn.Identity in the reference module, so the
    result does not depend on should_apply_shortcut.

    alias_output: enable only when embedded in a jitted model where the input
    slab is donatable; it sets input_output_aliases={0: 0} to drop peak HBM
    footprint. Default False because without donation the runtime would insert
    a defensive full-tensor copy (worse than no aliasing for a mem-bound op).
    """
    orig_shape = x.shape
    orig_dtype = x.dtype
    total = x.size
    itemsize = jnp.dtype(orig_dtype).itemsize

    rows = _cdiv(total, _LANES)
    padded_total = rows * _LANES

    x_flat = x.reshape(-1)
    needs_pad = padded_total != total
    if needs_pad:
        # Rare path (total not a multiple of 128): one extra HBM copy.
        x_flat = jnp.pad(x_flat, (0, padded_total - total))
    x2d = x_flat.reshape(rows, _LANES)                 # contiguous reshape: free

    tile_rows = _choose_tile_rows(rows, itemsize)
    grid = (_cdiv(rows, tile_rows),)                   # partial last block is OK
    spec = pl.BlockSpec((tile_rows, _LANES), lambda i: (i, 0))

    out2d = pl.pallas_call(
        _residual_relu_kernel,
        out_shape=jax.ShapeDtypeStruct((rows, _LANES), orig_dtype),
        grid_spec=pltpu.PrefetchScalarGridSpec(
            num_scalar_prefetch=0,
            grid=grid,
            in_specs=[spec],
            out_specs=spec,
        ),
        input_output_aliases=({0: 0} if alias_output else {}),
        compiler_params=pltpu.CompilerParams(
            dimension_semantics=("parallel",),
            # Explicit headroom (safe on v5e through v7x); actual VMEM use is
            # ~4 x tile bytes <= ~4 MiB with ~1 MiB blocks.
            vmem_limit_bytes=32 * 1024 * 1024,
        ),
    )(x2d)

    if needs_pad:
        return out2d.reshape(-1)[:total].reshape(orig_shape)
    return out2d.reshape(orig_shape)


if __name__ == "__main__":
    key = jax.random.PRNGKey(0)
    N, C, H, W = 2, 4, 16, 16
    in_channels, out_channels = C, C  # Identity shortcut either way

    x = jax.random.normal(key, (N, C, H, W), dtype=jnp.float32)

    out = residual_block_forward(x, in_channels, out_channels)
    out = jax.block_until_ready(out)

    # Reference: relu(x + x)
    ref = jnp.maximum(x + x, 0.0)
    assert out.shape == x.shape and out.dtype == x.dtype
    assert jnp.allclose(out, ref, atol=1e-6), "mismatch vs reference"

    print("KERNEL_OK")
</pallas_src>

<mosaic_0001>
module attributes {stable_mosaic.version = 11 : i64} {
  func.func @_residual_relu_kernel(%arg0: i32, %arg1: memref<16x128xf32, #tpu.memory_space<vmem>>, %arg2: memref<16x128xf32, #tpu.memory_space<vmem>>) attributes {dimension_semantics = [#tpu.dimension_semantics<parallel>], iteration_bounds = array<i64: 1>, scalar_prefetch = 0 : i64, scratch_operands = 0 : i64, tpu.core_type = #tpu.core_type<tc>, window_params = [{transform_indices = @transform_0, window_bounds = array<i64: 16, 128>}, {transform_indices = @transform_1, window_bounds = array<i64: 16, 128>}]} {
    %c0 = arith.constant 0 : index
    %c0_0 = arith.constant 0 : index
    %0 = vector.load %arg1[%c0, %c0_0] : memref<16x128xf32, #tpu.memory_space<vmem>>, vector<16x128xf32>
    %1 = arith.addf %0, %0 : vector<16x128xf32>
    %cst = arith.constant 0.000000e+00 : f32
    %2 = vector.broadcast %cst : f32 to vector<16x128xf32>
    %3 = arith.maximumf %1, %2 : vector<16x128xf32>
    %c0_1 = arith.constant 0 : index
    %c0_2 = arith.constant 0 : index
    %4 = vector.load %arg2[%c0_1, %c0_2] : memref<16x128xf32, #tpu.memory_space<vmem>>, vector<16x128xf32>
    tpu.vector_store %arg2[%c0_1, %c0_2], %3 {strides = array<i32>} : memref<16x128xf32, #tpu.memory_space<vmem>>, vector<16x128xf32>,
    return
  }
  func.func @transform_0(%arg0: i32) -> (i32, i32) {
    %c0_i32 = arith.constant 0 : i32
    %c0_i32_0 = arith.constant 0 : i32
    return %arg0, %c0_i32 : i32, i32
  }
  func.func @transform_1(%arg0: i32) -> (i32, i32) {
    %c0_i32 = arith.constant 0 : i32
    %c0_i32_0 = arith.constant 0 : i32
    return %arg0, %c0_i32 : i32, i32
  }
}

</mosaic_0001>

<llo_original>
// kernel: tpu_custom_call.1
$region0: #{tpu_custom_call.1}
  #allocation0 [shape = 'u32[]', space=smem, size = 0x4, offset = 0x4, fixed_abs, tag = 'smem constant byte address 0x4 - core index']
  #allocation1 [shape = 'u32[144,128]{1,0:T(1,128)}', space=vmem, size = 0x12000, scoped, tag = 'internal scratch']
  %s0 = inlined_call_operand.hbm [shape: f32[16,128], index: 0, kind: input, shape index: {}]
  %s1 = inlined_call_operand.hbm [shape: f32[16,128], index: 1, kind: output, shape index: {}]
  %s2 = sld [smem:[#allocation0]]
  $region18: #{tpu_custom_call.1} parent=0
    _
  %s4 = ssub.s32 1, %s2
  %s5 = scalar_select 0, %s4, %s2
  $region1: #{tpu_custom_call.1} parent=0
    #allocation2 [shape = 'u8[8192]{0}', space=vmem, size = 0x2000, scoped, tag = 'input window, operand 0, single buffered']
    #allocation3 [shape = 's32[1]{0}', space=sflag, size = 0x4, scoped, tag = 'scoped memory for tpu_custom_call.1']
    #allocation4 [shape = 's32[1]{0}', space=sflag, size = 0x4, scoped, tag = 'scoped memory for tpu_custom_call.1']
    #allocation5 [shape = 'u8[8192]{0}', space=vmem, size = 0x2000, scoped, tag = 'output window, operand 0, single buffered']
    %6 = vsyncpa [#allocation3], 0
    %7 = vsyncpa [#allocation4], 0
    // Predicated region
    $region2: #{tpu_custom_call.1} parent=1 // pred_check
      _
    $region3: #{tpu_custom_call.1} parent=1 // pred_check_branch
      %9 = sbr.rel (0) target = $region5
    $region4: #{tpu_custom_call.1} parent=1 // pred_region
      %s11 = ssub.s32 256, 256
      %12 = vsyncadd [#allocation3], %s11
      %s13 = sshll.u32 [#allocation2], 4
      %s14 = int_to_ptr.vmem [resolvable:$true] %s13
      %19 = dma.hbm_to_vmem [thread:$0]  %s0, 256, %s14, [#allocation3], 128, 128, 8
    $region5: #{tpu_custom_call.1} parent=1 // pred_fallthru
      _
    // Predicated region
    $region6: #{tpu_custom_call.1} parent=1 // pred_check
      _
    $region7: #{tpu_custom_call.1} parent=1 // pred_check_branch
      %21 = sbr.rel (0) target = $region9
    $region8: #{tpu_custom_call.1} parent=1 // pred_region
      %22 = dma.done [#allocation3], 256
    $region9: #{tpu_custom_call.1} parent=1 // pred_fallthru
      _
    %v23 = vld [vmem:[#allocation2] sm:$0xff]
    %v24 = vld [vmem:[#allocation2 + $0x8] sm:$0xff]
    %v25 = vadd.f32 %v23, %v23
    %v26 = vadd.f32 %v24, %v24
    %v27 = vmax.f32 %v25, 0.0
    %v28 = vmax.f32 %v26, 0.0
    %29 = vst [vmem:[#allocation5] sm:$0xff] %v27
    %30 = vst [vmem:[#allocation5 + $0x8] sm:$0xff] %v28
    // Predicated region
    $region10: #{tpu_custom_call.1} parent=1 // pred_check
      _
    $region11: #{tpu_custom_call.1} parent=1 // pred_check_branch
      %32 = sbr.rel (0) target = $region13
    $region12: #{tpu_custom_call.1} parent=1 // pred_region
      %s34 = ssub.s32 256, 256
      %35 = vsyncadd [#allocation4], %s34
      %s36 = sshll.u32 [#allocation5], 4
      %s37 = int_to_ptr.vmem [resolvable:$true] %s36
      %42 = dma.vmem_to_hbm [thread:$0]  %s37, 256, %s1, [#allocation4], 128, 128, 8
    $region13: #{tpu_custom_call.1} parent=1 // pred_fallthru
      _
    // Predicated region
    $region14: #{tpu_custom_call.1} parent=1 // pred_check
      _
    $region15: #{tpu_custom_call.1} parent=1 // pred_check_branch
      %44 = sbr.rel (0) target = $region17
    $region16: #{tpu_custom_call.1} parent=1 // pred_region
      %45 = dma.done [#allocation4], 256
    $region17: #{tpu_custom_call.1} parent=1 // pred_fallthru
      _
    %46 = vsyncpa [#allocation3], 1
    %47 = vsyncpa [#allocation4], 1

</llo_original>
